<compile_context>
chip_gen: v7x
topology: tpu7x:2x2x1
jax: 0.10.0
libtpu: 0.0.40
codegen_flags: <defaults>
</compile_context>

<pallas_src>
import functools

import jax
import jax.numpy as jnp
from jax import lax
from jax.experimental import pallas as pl
from jax.experimental.pallas import tpu as pltpu

_BN_EPS = 1e-5


def _vmem_limit_bytes():
    """Generation-dependent VMEM budget (~3/4 of physical capacity)."""
    cap = 64 * 1024 * 1024                      # safe default (v7x-sized)
    try:
        info = pltpu.get_tpu_info()
        v = int(getattr(info, "vmem_capacity_bytes", 0) or 0)
        if v > 0:
            cap = v
    except Exception:
        pass
    return max(32 * 1024 * 1024, (cap * 3) // 4)


def _conv_relu_bn_kernel(x_ref, w_ref, b_ref, g_ref, bt_ref, out_ref, xs_ref, sum_ref,
                         *, c_in, k_size, stride, l_out):
    """One grid step = Nb batches: stage im2col operand, one MXU matmul, bias+ReLU,
    accumulate BN sums; last step finalizes mean / exact variance and normalizes the
    VMEM-resident output in place."""
    i = pl.program_id(0)
    n_steps = pl.num_programs(0)
    nb = x_ref.shape[2]                      # batches per grid step
    n_total = out_ref.shape[0]
    c_out = out_ref.shape[1]

    @pl.when(i == 0)
    def _init():
        sum_ref[...] = jnp.zeros_like(sum_ref)

    # Stage the stacked-taps / batch-merged RHS operand entirely in VMEM:
    #   xs[k*C_in + ci, nloc*L_out + j] = x[nloc, ci, j*stride + k]   (bf16)
    # K*Nb small static slice copies (VMEM -> VMEM); x itself comes from HBM only once.
    for k in range(k_size):
        p, off = k % stride, k // stride
        for nloc in range(nb):
            xs_ref[k * c_in:(k + 1) * c_in, nloc * l_out:(nloc + 1) * l_out] = (
                x_ref[p * c_in:(p + 1) * c_in, 0, nloc, off:off + l_out])

    # ONE matmul with contraction K*C_in and lane width Nb*L_out; f32 accumulation.
    y = jnp.dot(w_ref[...], xs_ref[...], preferred_element_type=jnp.float32)
    y = jnp.maximum(y + b_ref[...], 0.0)     # bias + ReLU (f32 epilogue)

    # Global BN batch statistics (per-channel sums over the whole batch).
    sum_ref[...] += jnp.sum(y, axis=1, keepdims=True)

    # Stash the (unnormalized) activations in the VMEM-resident output block.
    for nloc in range(nb):
        out_ref[i * nb + nloc] = y[:, nloc * l_out:(nloc + 1) * l_out]

    @pl.when(i == n_steps - 1)
    def _finalize():
        inv_cnt = 1.0 / float(n_total * l_out)
        mean = sum_ref[...] * inv_cnt                      # (C_out, 1)

        # Exact (centered, two-pass) variance over the VMEM-resident activations.
        def _var_body(nidx, acc):
            c = out_ref[nidx] - mean
            return acc + jnp.sum(c * c, axis=1, keepdims=True)
        ssq = lax.fori_loop(0, n_total, _var_body,
                            jnp.zeros((c_out, 1), jnp.float32))
        inv_std = lax.rsqrt(ssq * inv_cnt + _BN_EPS)
        scale = g_ref[...] * inv_std
        shift = bt_ref[...] - mean * scale

        # Normalize the resident block in place; it is written back to HBM once.
        def _norm_body(nidx, carry):
            out_ref[nidx] = out_ref[nidx] * scale + shift
            return carry
        lax.fori_loop(0, n_total, _norm_body, 0)


@functools.partial(jax.jit, static_argnames=("stride",))
def conv_block(x, weight, bias, gamma, beta, *, stride):
    """Conv1d(valid, stride) -> ReLU -> BatchNorm1d (training-mode batch stats).

    x: (N, C_in, L) f32, weight: (C_out, C_in, K), bias/gamma/beta: (C_out,).
    Returns (N, C_out, L_out) f32 with L_out = (L - K)//stride + 1 (NCL, like PyTorch).
    """
    n, c_in, l = x.shape
    c_out, _, k_size = weight.shape
    s = int(stride)
    l_out = (l - k_size) // s + 1
    t = l_out + (k_size - 1) // s           # per-phase length needed by in-kernel slices
    l_pad = t * s

    vmem_limit = _vmem_limit_bytes()

    # --- choose how many batches to fold into one grid step ------------------------
    per_batch = (2 * s * c_in * t * 2               # x block (bf16, double-buffered)
                 + k_size * c_in * l_out * 2        # staged im2col slice (bf16)
                 + 2 * c_out * l_out * 4)           # matmul result / epilogue temps (f32)
    step_budget = max(vmem_limit // 8, 1 << 20)
    nb = 1
    for cand in range(1, n + 1):
        if n % cand:
            continue
        if cand * per_batch > step_budget:
            break
        nb = cand
        if cand * l_out >= 512:                     # enough lane width; stop growing
            break

    resident = n * c_out * l_out * 4                # VMEM-resident f32 output block
    est = resident + nb * per_batch + 2 * (c_out * k_size * c_in * 2 + 3 * c_out * 4)
    if est > (vmem_limit * 4) // 5:
        # TODO(synk): L_out halo tiling + two-pass bf16-intermediate fallback.
        raise NotImplementedError(
            "conv_block: activation too large for VMEM-resident single-pass BN")

    # --- wrapper-side layout: phase-decomposed, channel-major x (single 1x pass) ----
    # x_m[p*C_in + ci, g, nloc, t'] = x[g*nb + nloc, ci, t'*s + p]; padding (if any) is
    # never read by the tap slices used inside the kernel.
    if l_pad > l:
        xp = jnp.pad(x, ((0, 0), (0, 0), (0, l_pad - l)))
    else:
        xp = x[:, :, :l_pad]
    x_m = xp.reshape(n, c_in, t, s).transpose(3, 1, 0, 2)           # (s, C_in, N, T)
    x_m = x_m.reshape(s * c_in, n // nb, nb, t).astype(jnp.bfloat16)

    # w2[co, k*C_in + ci] = weight[co, ci, k]  (matches the staged xs row order)
    w2 = jnp.transpose(weight, (0, 2, 1)).reshape(c_out, k_size * c_in)
    w2 = w2.astype(jnp.bfloat16)

    b2 = bias.reshape(c_out, 1).astype(jnp.float32)
    g2 = gamma.reshape(c_out, 1).astype(jnp.float32)
    bt2 = beta.reshape(c_out, 1).astype(jnp.float32)

    vec_spec = pl.BlockSpec((c_out, 1), lambda i: (0, 0))

    flops = 2 * n * c_out * l_out * k_size * c_in + 10 * n * c_out * l_out
    bytes_accessed = (x_m.size * 2 + w2.size * 2
                      + n * c_out * l_out * 4 + 3 * c_out * 4)

    out = pl.pallas_call(
        functools.partial(_conv_relu_bn_kernel,
                          c_in=c_in, k_size=k_size, stride=s, l_out=l_out),
        out_shape=jax.ShapeDtypeStruct((n, c_out, l_out), jnp.float32),
        grid_spec=pltpu.PrefetchScalarGridSpec(
            num_scalar_prefetch=0,
            grid=(n // nb,),
            in_specs=[
                pl.BlockSpec((s * c_in, 1, nb, t), lambda i: (0, i, 0, 0)),
                pl.BlockSpec((c_out, k_size * c_in), lambda i: (0, 0)),
                vec_spec, vec_spec, vec_spec,
            ],
            # Constant index map -> the whole output stays resident in VMEM across the
            # batch grid and is written back to HBM exactly once (after normalization).
            out_specs=pl.BlockSpec((n, c_out, l_out), lambda i: (0, 0, 0)),
            scratch_shapes=[
                pltpu.VMEM((k_size * c_in, nb * l_out), jnp.bfloat16),  # staged im2col
                pltpu.VMEM((c_out, 1), jnp.float32),                    # running sum
            ],
        ),
        compiler_params=pltpu.CompilerParams(
            # BN statistics + resident output reduce over the batch grid -> "arbitrary".
            dimension_semantics=("arbitrary",),
            vmem_limit_bytes=int(vmem_limit),
        ),
        cost_estimate=pl.CostEstimate(flops=flops, transcendentals=c_out,
                                      bytes_accessed=bytes_accessed),
    )(x_m, w2, b2, g2, bt2)
    return out


def _reference(x, weight, bias, gamma, beta, stride):
    """Pure-JAX reference using the same bf16-rounded conv operands the kernel sees."""
    xq = x.astype(jnp.bfloat16).astype(jnp.float32)
    wq = weight.astype(jnp.bfloat16).astype(jnp.float32)
    y = lax.conv_general_dilated(xq, wq, window_strides=(stride,), padding="VALID",
                                 dimension_numbers=("NCH", "OIH", "NCH"))
    y = jnp.maximum(y + bias[None, :, None], 0.0)
    mean = y.mean(axis=(0, 2), keepdims=True)
    var = ((y - mean) ** 2).mean(axis=(0, 2), keepdims=True)
    return (y - mean) * lax.rsqrt(var + _BN_EPS) * gamma[None, :, None] + beta[None, :, None]


if __name__ == "__main__":
    key = jax.random.PRNGKey(0)
    # (C_in, C_out, K, stride, N, L): first UNet encoder block (k=3, s=1), a strided
    # variant, and a 1x1 decoder-head conv block.
    configs = [(4, 16, 3, 1, 2, 32),
               (4, 8, 3, 2, 2, 16),
               (16, 8, 1, 1, 2, 16)]
    for c_in, c_out, ksz, stride, nbatch, length in configs:
        key, kx, kw, kb, kg, kbt = jax.random.split(key, 6)
        x = jax.random.normal(kx, (nbatch, c_in, length), dtype=jnp.float32)
        bound = 1.0 / (c_in * ksz) ** 0.5
        weight = jax.random.uniform(kw, (c_out, c_in, ksz), minval=-bound, maxval=bound,
                                    dtype=jnp.float32)
        bias = jax.random.uniform(kb, (c_out,), minval=-bound, maxval=bound,
                                  dtype=jnp.float32)
        gamma = jax.random.uniform(kg, (c_out,), minval=0.5, maxval=1.5, dtype=jnp.float32)
        beta = 0.1 * jax.random.normal(kbt, (c_out,), dtype=jnp.float32)

        out = conv_block(x, weight, bias, gamma, beta, stride=stride)
        out = jax.block_until_ready(out)

        l_out = (length - ksz) // stride + 1
        assert out.shape == (nbatch, c_out, l_out), out.shape

        ref = _reference(x, weight, bias, gamma, beta, stride)
        err = float(jnp.max(jnp.abs(out - ref)))
        assert err < 2e-3, (c_in, c_out, ksz, stride, err)

    print("KERNEL_OK")
</pallas_src>

<mosaic_0001>
module attributes {stable_mosaic.version = 11 : i64} {
  func.func @_conv_relu_bn_kernel(%arg0: i32, %arg1: memref<4x1x2x32xbf16, #tpu.memory_space<vmem>>, %arg2: memref<16x12xbf16, #tpu.memory_space<vmem>>, %arg3: memref<16x1xf32, #tpu.memory_space<vmem>>, %arg4: memref<16x1xf32, #tpu.memory_space<vmem>>, %arg5: memref<16x1xf32, #tpu.memory_space<vmem>>, %arg6: memref<2x16x30xf32, #tpu.memory_space<vmem>>, %arg7: memref<12x60xbf16, #tpu.memory_space<vmem>>, %arg8: memref<16x1xf32, #tpu.memory_space<vmem>>) attributes {dimension_semantics = [#tpu.dimension_semantics<arbitrary>], iteration_bounds = array<i64: 1>, scalar_prefetch = 0 : i64, scratch_operands = 2 : i64, tpu.core_type = #tpu.core_type<tc>, window_params = [{transform_indices = @transform_0, window_bounds = array<i64: 4, 1, 2, 32>}, {pipeline_mode = #tpu.pipeline_mode<synchronous>, transform_indices = @transform_1, window_bounds = array<i64: 16, 12>}, {pipeline_mode = #tpu.pipeline_mode<synchronous>, transform_indices = @transform_2, window_bounds = array<i64: 16, 1>}, {pipeline_mode = #tpu.pipeline_mode<synchronous>, transform_indices = @transform_3, window_bounds = array<i64: 16, 1>}, {pipeline_mode = #tpu.pipeline_mode<synchronous>, transform_indices = @transform_4, window_bounds = array<i64: 16, 1>}, {pipeline_mode = #tpu.pipeline_mode<synchronous>, transform_indices = @transform_5, window_bounds = array<i64: 2, 16, 30>}]} {
    %c0_i32 = arith.constant 0 : i32
    %0 = arith.cmpi eq, %arg0, %c0_i32 : i32
    %1 = arith.extui %0 : i1 to i32
    %c0_i32_0 = arith.constant 0 : i32
    %2 = arith.cmpi ne, %1, %c0_i32_0 : i32
    scf.if %2 {
      %cst_51 = arith.constant 0.000000e+00 : f32
      %51 = vector.broadcast %cst_51 : f32 to vector<16x1xf32>
      %c0_52 = arith.constant 0 : index
      %c0_53 = arith.constant 0 : index
      %52 = vector.load %arg8[%c0_52, %c0_53] : memref<16x1xf32, #tpu.memory_space<vmem>>, vector<16x1xf32>
      tpu.vector_store %arg8[%c0_52, %c0_53], %51 {strides = array<i32>} : memref<16x1xf32, #tpu.memory_space<vmem>>, vector<16x1xf32>,
    } else {
    }
    %c0 = arith.constant 0 : index
    %c0_1 = arith.constant 0 : index
    %c0_2 = arith.constant 0 : index
    %c0_3 = arith.constant 0 : index
    %3 = vector.load %arg1[%c0, %c0_1, %c0_2, %c0_3] : memref<4x1x2x32xbf16, #tpu.memory_space<vmem>>, vector<4x1x1x30xbf16>
    %4 = vector.shape_cast %3 : vector<4x1x1x30xbf16> to vector<4x30xbf16>
    %c0_4 = arith.constant 0 : index
    %c0_5 = arith.constant 0 : index
    %5 = vector.load %arg7[%c0_4, %c0_5] : memref<12x60xbf16, #tpu.memory_space<vmem>>, vector<4x30xbf16>
    tpu.vector_store %arg7[%c0_4, %c0_5], %4 {strides = array<i32>} : memref<12x60xbf16, #tpu.memory_space<vmem>>, vector<4x30xbf16>,
    %c0_6 = arith.constant 0 : index
    %c0_7 = arith.constant 0 : index
    %c1 = arith.constant 1 : index
    %c0_8 = arith.constant 0 : index
    %6 = vector.load %arg1[%c0_6, %c0_7, %c1, %c0_8] : memref<4x1x2x32xbf16, #tpu.memory_space<vmem>>, vector<4x1x1x30xbf16>
    %7 = vector.shape_cast %6 : vector<4x1x1x30xbf16> to vector<4x30xbf16>
    %c0_9 = arith.constant 0 : index
    %c30 = arith.constant 30 : index
    %8 = vector.load %arg7[%c0_9, %c30] : memref<12x60xbf16, #tpu.memory_space<vmem>>, vector<4x30xbf16>
    tpu.vector_store %arg7[%c0_9, %c30], %7 {strides = array<i32>} : memref<12x60xbf16, #tpu.memory_space<vmem>>, vector<4x30xbf16>,
    %c0_10 = arith.constant 0 : index
    %c0_11 = arith.constant 0 : index
    %c0_12 = arith.constant 0 : index
    %c1_13 = arith.constant 1 : index
    %9 = vector.load %arg1[%c0_10, %c0_11, %c0_12, %c1_13] : memref<4x1x2x32xbf16, #tpu.memory_space<vmem>>, vector<4x1x1x30xbf16>
    %10 = vector.shape_cast %9 : vector<4x1x1x30xbf16> to vector<4x30xbf16>
    %c4 = arith.constant 4 : index
    %c0_14 = arith.constant 0 : index
    %11 = vector.load %arg7[%c4, %c0_14] : memref<12x60xbf16, #tpu.memory_space<vmem>>, vector<4x30xbf16>
    tpu.vector_store %arg7[%c4, %c0_14], %10 {strides = array<i32>} : memref<12x60xbf16, #tpu.memory_space<vmem>>, vector<4x30xbf16>,
    %c0_15 = arith.constant 0 : index
    %c0_16 = arith.constant 0 : index
    %c1_17 = arith.constant 1 : index
    %c1_18 = arith.constant 1 : index
    %12 = vector.load %arg1[%c0_15, %c0_16, %c1_17, %c1_18] : memref<4x1x2x32xbf16, #tpu.memory_space<vmem>>, vector<4x1x1x30xbf16>
    %13 = vector.shape_cast %12 : vector<4x1x1x30xbf16> to vector<4x30xbf16>
    %c4_19 = arith.constant 4 : index
    %c30_20 = arith.constant 30 : index
    %14 = vector.load %arg7[%c4_19, %c30_20] : memref<12x60xbf16, #tpu.memory_space<vmem>>, vector<4x30xbf16>
    tpu.vector_store %arg7[%c4_19, %c30_20], %13 {strides = array<i32>} : memref<12x60xbf16, #tpu.memory_space<vmem>>, vector<4x30xbf16>,
    %c0_21 = arith.constant 0 : index
    %c0_22 = arith.constant 0 : index
    %c0_23 = arith.constant 0 : index
    %c2 = arith.constant 2 : index
    %15 = vector.load %arg1[%c0_21, %c0_22, %c0_23, %c2] : memref<4x1x2x32xbf16, #tpu.memory_space<vmem>>, vector<4x1x1x30xbf16>
    %16 = vector.shape_cast %15 : vector<4x1x1x30xbf16> to vector<4x30xbf16>
    %c8 = arith.constant 8 : index
    %c0_24 = arith.constant 0 : index
    %17 = vector.load %arg7[%c8, %c0_24] : memref<12x60xbf16, #tpu.memory_space<vmem>>, vector<4x30xbf16>
    tpu.vector_store %arg7[%c8, %c0_24], %16 {strides = array<i32>} : memref<12x60xbf16, #tpu.memory_space<vmem>>, vector<4x30xbf16>,
    %c0_25 = arith.constant 0 : index
    %c0_26 = arith.constant 0 : index
    %c1_27 = arith.constant 1 : index
    %c2_28 = arith.constant 2 : index
    %18 = vector.load %arg1[%c0_25, %c0_26, %c1_27, %c2_28] : memref<4x1x2x32xbf16, #tpu.memory_space<vmem>>, vector<4x1x1x30xbf16>
    %19 = vector.shape_cast %18 : vector<4x1x1x30xbf16> to vector<4x30xbf16>
    %c8_29 = arith.constant 8 : index
    %c30_30 = arith.constant 30 : index
    %20 = vector.load %arg7[%c8_29, %c30_30] : memref<12x60xbf16, #tpu.memory_space<vmem>>, vector<4x30xbf16>
    tpu.vector_store %arg7[%c8_29, %c30_30], %19 {strides = array<i32>} : memref<12x60xbf16, #tpu.memory_space<vmem>>, vector<4x30xbf16>,
    %c0_31 = arith.constant 0 : index
    %c0_32 = arith.constant 0 : index
    %21 = vector.load %arg2[%c0_31, %c0_32] : memref<16x12xbf16, #tpu.memory_space<vmem>>, vector<16x12xbf16>
    %c0_33 = arith.constant 0 : index
    %c0_34 = arith.constant 0 : index
    %22 = vector.load %arg7[%c0_33, %c0_34] : memref<12x60xbf16, #tpu.memory_space<vmem>>, vector<12x60xbf16>
    %cst = arith.constant dense<0.000000e+00> : vector<16x60xf32>
    %23 = tpu.matmul %21, %22, %cst {dimension_numbers = #tpu.dot_dimension_numbers<[1], [0], [0], [1], [0, 0, 1, 1], [], []>} : vector<16x12xbf16>, vector<12x60xbf16>, vector<16x60xf32> -> vector<16x60xf32>
    %c0_35 = arith.constant 0 : index
    %c0_36 = arith.constant 0 : index
    %24 = vector.load %arg3[%c0_35, %c0_36] : memref<16x1xf32, #tpu.memory_space<vmem>>, vector<16x1xf32>
    %25 = vector.broadcast %24 : vector<16x1xf32> to vector<16x60xf32>
    %26 = arith.addf %23, %25 : vector<16x60xf32>
    %cst_37 = arith.constant 0.000000e+00 : f32
    %27 = vector.broadcast %cst_37 : f32 to vector<16x60xf32>
    %28 = arith.maximumf %26, %27 : vector<16x60xf32>
    %c0_38 = arith.constant 0 : index
    %c0_39 = arith.constant 0 : index
    %29 = vector.load %arg8[%c0_38, %c0_39] : memref<16x1xf32, #tpu.memory_space<vmem>>, vector<16x1xf32>
    %cst_40 = arith.constant dense<0.000000e+00> : vector<16xf32>
    %30 = vector.multi_reduction <add>, %28, %cst_40 [1] : vector<16x60xf32> to vector<16xf32>
    %31 = vector.shape_cast %30 : vector<16xf32> to vector<16x1xf32>
    %32 = arith.addf %29, %31 : vector<16x1xf32>
    %c0_41 = arith.constant 0 : index
    %c0_42 = arith.constant 0 : index
    %33 = vector.load %arg8[%c0_41, %c0_42] : memref<16x1xf32, #tpu.memory_space<vmem>>, vector<16x1xf32>
    tpu.vector_store %arg8[%c0_41, %c0_42], %32 {strides = array<i32>} : memref<16x1xf32, #tpu.memory_space<vmem>>, vector<16x1xf32>,
    %34 = vector.extract_strided_slice %28 {offsets = [0, 0], sizes = [16, 30], strides = [1, 1]} : vector<16x60xf32> to vector<16x30xf32>
    %c2_i32 = arith.constant 2 : i32
    %35 = arith.muli %arg0, %c2_i32 : i32
    %c0_i32_43 = arith.constant 0 : i32
    %36 = arith.addi %35, %c0_i32_43 : i32
    %37 = arith.index_cast %36 : i32 to index
    %c0_44 = arith.constant 0 : index
    %c0_45 = arith.constant 0 : index
    %38 = vector.load %arg6[%37, %c0_44, %c0_45] : memref<2x16x30xf32, #tpu.memory_space<vmem>>, vector<1x16x30xf32>
    %39 = vector.shape_cast %38 : vector<1x16x30xf32> to vector<16x30xf32>
    %40 = vector.shape_cast %34 : vector<16x30xf32> to vector<1x16x30xf32>
    tpu.vector_store %arg6[%37, %c0_44, %c0_45], %40 {strides = array<i32>} : memref<2x16x30xf32, #tpu.memory_space<vmem>>, vector<1x16x30xf32>,
    %41 = vector.extract_strided_slice %28 {offsets = [0, 30], sizes = [16, 30], strides = [1, 1]} : vector<16x60xf32> to vector<16x30xf32>
    %c2_i32_46 = arith.constant 2 : i32
    %42 = arith.muli %arg0, %c2_i32_46 : i32
    %c1_i32 = arith.constant 1 : i32
    %43 = arith.addi %42, %c1_i32 : i32
    %44 = arith.index_cast %43 : i32 to index
    %c0_47 = arith.constant 0 : index
    %c0_48 = arith.constant 0 : index
    %45 = vector.load %arg6[%44, %c0_47, %c0_48] : memref<2x16x30xf32, #tpu.memory_space<vmem>>, vector<1x16x30xf32>
    %46 = vector.shape_cast %45 : vector<1x16x30xf32> to vector<16x30xf32>
    %47 = vector.shape_cast %41 : vector<16x30xf32> to vector<1x16x30xf32>
    tpu.vector_store %arg6[%44, %c0_47, %c0_48], %47 {strides = array<i32>} : memref<2x16x30xf32, #tpu.memory_space<vmem>>, vector<1x16x30xf32>,
    %c0_i32_49 = arith.constant 0 : i32
    %48 = arith.cmpi eq, %arg0, %c0_i32_49 : i32
    %49 = arith.extui %48 : i1 to i32
    %c0_i32_50 = arith.constant 0 : i32
    %50 = arith.cmpi ne, %49, %c0_i32_50 : i32
    scf.if %50 {
      %c0_51 = arith.constant 0 : index
      %c0_52 = arith.constant 0 : index
      %51 = vector.load %arg8[%c0_51, %c0_52] : memref<16x1xf32, #tpu.memory_space<vmem>>, vector<16x1xf32>
      %cst_53 = arith.constant 0.0166666675 : f32
      %52 = vector.broadcast %cst_53 : f32 to vector<16x1xf32>
      %53 = arith.mulf %51, %52 : vector<16x1xf32>
      %cst_54 = arith.constant 0.000000e+00 : f32
      %54 = vector.broadcast %cst_54 : f32 to vector<16x1xf32>
      %c0_i32_55 = arith.constant 0 : i32
      %c2_i32_56 = arith.constant 2 : i32
      %55 = arith.addi %c0_i32_55, %c2_i32_56 : i32
      %c1_i32_57 = arith.constant 1 : i32
      %56 = scf.for %arg9 = %c0_i32_55 to %55 step %c1_i32_57 iter_args(%arg10 = %54) -> (vector<16x1xf32>)  : i32 {
        %68 = arith.index_cast %arg9 : i32 to index
        %c0_69 = arith.constant 0 : index
        %c0_70 = arith.constant 0 : index
        %69 = vector.load %arg6[%68, %c0_69, %c0_70] : memref<2x16x30xf32, #tpu.memory_space<vmem>>, vector<1x16x30xf32>
        %70 = vector.shape_cast %69 : vector<1x16x30xf32> to vector<16x30xf32>
        %71 = vector.broadcast %53 : vector<16x1xf32> to vector<16x30xf32>
        %72 = arith.subf %70, %71 : vector<16x30xf32>
        %73 = arith.mulf %72, %72 : vector<16x30xf32>
        %cst_71 = arith.constant dense<0.000000e+00> : vector<16xf32>
        %74 = vector.multi_reduction <add>, %73, %cst_71 [1] : vector<16x30xf32> to vector<16xf32>
        %75 = vector.shape_cast %74 : vector<16xf32> to vector<16x1xf32>
        %76 = arith.addf %arg10, %75 : vector<16x1xf32>
        scf.yield %76 : vector<16x1xf32>
      }
      %c2_i32_58 = arith.constant 2 : i32
      %cst_59 = arith.constant 0.0166666675 : f32
      %57 = vector.broadcast %cst_59 : f32 to vector<16x1xf32>
      %58 = arith.mulf %56, %57 : vector<16x1xf32>
      %cst_60 = arith.constant 9.99999974E-6 : f32
      %59 = vector.broadcast %cst_60 : f32 to vector<16x1xf32>
      %60 = arith.addf %58, %59 : vector<16x1xf32>
      %61 = math.rsqrt %60 : vector<16x1xf32>
      %c0_61 = arith.constant 0 : index
      %c0_62 = arith.constant 0 : index
      %62 = vector.load %arg4[%c0_61, %c0_62] : memref<16x1xf32, #tpu.memory_space<vmem>>, vector<16x1xf32>
      %63 = arith.mulf %62, %61 : vector<16x1xf32>
      %c0_63 = arith.constant 0 : index
      %c0_64 = arith.constant 0 : index
      %64 = vector.load %arg5[%c0_63, %c0_64] : memref<16x1xf32, #tpu.memory_space<vmem>>, vector<16x1xf32>
      %65 = arith.mulf %53, %63 : vector<16x1xf32>
      %66 = arith.subf %64, %65 : vector<16x1xf32>
      %c0_i32_65 = arith.constant 0 : i32
      %c2_i32_66 = arith.constant 2 : i32
      %67 = arith.addi %c0_i32_65, %c2_i32_66 : i32
      %c1_i32_67 = arith.constant 1 : i32
      scf.for %arg9 = %c0_i32_65 to %67 step %c1_i32_67  : i32 {
        %68 = arith.index_cast %arg9 : i32 to index
        %c0_69 = arith.constant 0 : index
        %c0_70 = arith.constant 0 : index
        %69 = vector.load %arg6[%68, %c0_69, %c0_70] : memref<2x16x30xf32, #tpu.memory_space<vmem>>, vector<1x16x30xf32>
        %70 = vector.shape_cast %69 : vector<1x16x30xf32> to vector<16x30xf32>
        %71 = vector.broadcast %63 : vector<16x1xf32> to vector<16x30xf32>
        %72 = arith.mulf %70, %71 : vector<16x30xf32>
        %73 = vector.broadcast %66 : vector<16x1xf32> to vector<16x30xf32>
        %74 = arith.addf %72, %73 : vector<16x30xf32>
        %75 = arith.index_cast %arg9 : i32 to index
        %c0_71 = arith.constant 0 : index
        %c0_72 = arith.constant 0 : index
        %76 = vector.load %arg6[%75, %c0_71, %c0_72] : memref<2x16x30xf32, #tpu.memory_space<vmem>>, vector<1x16x30xf32>
        %77 = vector.shape_cast %76 : vector<1x16x30xf32> to vector<16x30xf32>
        %78 = vector.shape_cast %74 : vector<16x30xf32> to vector<1x16x30xf32>
        tpu.vector_store %arg6[%75, %c0_71, %c0_72], %78 {strides = array<i32>} : memref<2x16x30xf32, #tpu.memory_space<vmem>>, vector<1x16x30xf32>,
      }
      %c2_i32_68 = arith.constant 2 : i32
    } else {
    }
    return
  }
  func.func @transform_0(%arg0: i32) -> (i32, i32, i32, i32) {
    %c0_i32 = arith.constant 0 : i32
    %c0_i32_0 = arith.constant 0 : i32
    %c0_i32_1 = arith.constant 0 : i32
    %c0_i32_2 = arith.constant 0 : i32
    return %c0_i32, %arg0, %c0_i32_0, %c0_i32_1 : i32, i32, i32, i32
  }
  func.func @transform_1(%arg0: i32) -> (i32, i32) {
    %c0_i32 = arith.constant 0 : i32
    %c0_i32_0 = arith.constant 0 : i32
    %c0_i32_1 = arith.constant 0 : i32
    return %c0_i32, %c0_i32_0 : i32, i32
  }
  func.func @transform_2(%arg0: i32) -> (i32, i32) {
    %c0_i32 = arith.constant 0 : i32
    %c0_i32_0 = arith.constant 0 : i32
    %c0_i32_1 = arith.constant 0 : i32
    return %c0_i32, %c0_i32_0 : i32, i32
  }
  func.func @transform_3(%arg0: i32) -> (i32, i32) {
    %c0_i32 = arith.constant 0 : i32
    %c0_i32_0 = arith.constant 0 : i32
    %c0_i32_1 = arith.constant 0 : i32
    return %c0_i32, %c0_i32_0 : i32, i32
  }
  func.func @transform_4(%arg0: i32) -> (i32, i32) {
    %c0_i32 = arith.constant 0 : i32
    %c0_i32_0 = arith.constant 0 : i32
    %c0_i32_1 = arith.constant 0 : i32
    return %c0_i32, %c0_i32_0 : i32, i32
  }
  func.func @transform_5(%arg0: i32) -> (i32, i32, i32) {
    %c0_i32 = arith.constant 0 : i32
    %c0_i32_0 = arith.constant 0 : i32
    %c0_i32_1 = arith.constant 0 : i32
    %c0_i32_2 = arith.constant 0 : i32
    return %c0_i32, %c0_i32_0, %c0_i32_1 : i32, i32, i32
  }
}

</mosaic_0001>

<llo_original>
// kernel: conv_block.1
$region0: #{conv_block.1}
  #allocation0 [shape = 'u32[]', space=smem, size = 0x4, offset = 0x4, fixed_abs, tag = 'smem constant byte address 0x4 - core index']
  #allocation1 [shape = 'u32[144,128]{1,0:T(1,128)}', space=vmem, size = 0x12000, scoped, tag = 'internal scratch']
  #allocation2 [shape = 'bf16[12,60]{1,0:T(8,128)(2,1)}', space=vmem, size = 0x1000, scoped, tag = 'scratch operand']
  #allocation3 [shape = 'f32[16,1]{1,0:T(8,128)}', space=vmem, size = 0x2000, scoped, tag = 'scratch operand']
  %s0 = inlined_call_operand.vmem [shape: bf16[4,1,2,32], index: 0, kind: input, shape index: {}]
  %s1 = inlined_call_operand.vmem [shape: bf16[16,12], index: 1, kind: input, shape index: {}]
  %s2 = inlined_call_operand.vmem [shape: f32[16,1], index: 2, kind: input, shape index: {}]
  %s3 = inlined_call_operand.vmem [shape: f32[16,1], index: 3, kind: input, shape index: {}]
  %s4 = inlined_call_operand.vmem [shape: f32[16,1], index: 4, kind: input, shape index: {}]
  %s5 = inlined_call_operand.hbm [shape: f32[2,16,30], index: 5, kind: output, shape index: {}]
  %s6 = sld [smem:[#allocation0]]
  $region52: #{conv_block.1} parent=0
    _
  %s8 = ssub.s32 1, %s6
  %s9 = scalar_select 0, %s8, %s6
  $region1: #{conv_block.1} parent=0
    #allocation4 [shape = 'u8[16384]{0}', space=vmem, size = 0x4000, scoped, tag = 'output window, operand 0, single buffered']
    #allocation5 [shape = 's32[1]{0}', space=sflag, size = 0x4, scoped, tag = 'scoped memory for conv_block.1']
    %10 = vsyncpa [#allocation5], 0
    // Predicated region
    $region2: #{conv_block.1} parent=1 // pred_check
      _
    $region3: #{conv_block.1} parent=1 // pred_check_branch
      %12 = sbr.rel (0) target = $region5
    $region4: #{conv_block.1} parent=1 // pred_region
      _
    $region5: #{conv_block.1} parent=1 // pred_fallthru
      _
    // Predicated region
    $region6: #{conv_block.1} parent=1 // pred_check
      _
    $region7: #{conv_block.1} parent=1 // pred_check_branch
      %14 = sbr.rel (0) target = $region9
    $region8: #{conv_block.1} parent=1 // pred_region
      _
    $region9: #{conv_block.1} parent=1 // pred_fallthru
      _
    // Predicated region
    $region10: #{conv_block.1} parent=1 // pred_check
      _
    $region11: #{conv_block.1} parent=1 // pred_check_branch
      %16 = sbr.rel (0) target = $region13
    $region12: #{conv_block.1} parent=1 // pred_region
      _
    $region13: #{conv_block.1} parent=1 // pred_fallthru
      _
    // Predicated region
    $region14: #{conv_block.1} parent=1 // pred_check
      _
    $region15: #{conv_block.1} parent=1 // pred_check_branch
      %18 = sbr.rel (0) target = $region17
    $region16: #{conv_block.1} parent=1 // pred_region
      _
    $region17: #{conv_block.1} parent=1 // pred_fallthru
      _
    // Predicated region
    $region18: #{conv_block.1} parent=1 // pred_check
      _
    $region19: #{conv_block.1} parent=1 // pred_check_branch
      %20 = sbr.rel (0) target = $region21
    $region20: #{conv_block.1} parent=1 // pred_region
      _
    $region21: #{conv_block.1} parent=1 // pred_fallthru
      _
    %p22 = scmp.eq.s32.totalorder 0, 0
    // Predicated region
    $region22: #{conv_block.1} parent=1 // pred_check
      %p23 = pneg %p22
    $region23: #{conv_block.1} parent=1 // pred_check_branch
      %25 = sbr.rel (%p23) target = $region25
    $region24: #{conv_block.1} parent=1 // pred_region
      %vm26 = vcmask 7168
      %27 = vst.msk [vmem:[#allocation3] sm:$0xff] %vm26, 0.0
      %28 = vst.msk [vmem:[#allocation3 + $0x8] sm:$0xff] %vm26, 0.0
    $region25: #{conv_block.1} parent=1 // pred_fallthru
      _
    %v29 = vld [vmem:[%s0] sm:$0x1]
    %v30 = vld [vmem:[%s0 + $0x1] sm:$0x1]
    %v31 = vld [vmem:[%s0 + $0x2] sm:$0x1]
    %v32 = vld [vmem:[%s0 + $0x3] sm:$0x1]
    %v38 = vunpack.c.l.s4 1935823168
    %v39 = vunpack.c.0.s8 %v38
    %v40 = vlaneseq
    %v41 = vshrl.u32 %v40, 7
    %v42 = vsub.s32 %v39, %v41
    %v43 = vrot.slane %v29, %v42
    %v45 = vunpack.c.l.s4 1935823168
    %v46 = vunpack.c.0.s8 %v45
    %v47 = vlaneseq
    %v48 = vshrl.u32 %v47, 7
    %v49 = vsub.s32 %v46, %v48
    %v50 = vrot.slane %v43, %v49
    %v52 = vunpack.c.l.s4 1935823168
    %v53 = vunpack.c.0.s8 %v52
    %v54 = vlaneseq
    %v55 = vshrl.u32 %v54, 7
    %v56 = vsub.s32 %v53, %v55
    %v57 = vrot.slane %v30, %v56
    %v59 = vunpack.c.l.s4 1935823168
    %v60 = vunpack.c.0.s8 %v59
    %v61 = vlaneseq
    %v62 = vshrl.u32 %v61, 7
    %v63 = vsub.s32 %v60, %v62
    %v64 = vrot.slane %v57, %v63
    %v66 = vunpack.c.l.s4 1935823168
    %v67 = vunpack.c.0.s8 %v66
    %v68 = vlaneseq
    %v69 = vshrl.u32 %v68, 7
    %v70 = vsub.s32 %v67, %v69
    %v71 = vrot.slane %v31, %v70
    %v73 = vunpack.c.l.s4 1935823168
    %v74 = vunpack.c.0.s8 %v73
    %v75 = vlaneseq
    %v76 = vshrl.u32 %v75, 7
    %v77 = vsub.s32 %v74, %v76
    %v78 = vrot.slane %v71, %v77
    %v80 = vunpack.c.l.s4 1935823168
    %v81 = vunpack.c.0.s8 %v80
    %v82 = vlaneseq
    %v83 = vshrl.u32 %v82, 7
    %v84 = vsub.s32 %v81, %v83
    %v85 = vrot.slane %v32, %v84
    %v87 = vunpack.c.l.s4 1935823168
    %v88 = vunpack.c.0.s8 %v87
    %v89 = vlaneseq
    %v90 = vshrl.u32 %v89, 7
    %v91 = vsub.s32 %v88, %v90
    %v92 = vrot.slane %v85, %v91
    %v93 = vunpack.c.l.b16 %v50
    %v94 = vunpack.c.l.b16 %v64
    %v95 = vunpack.c.l.b16 %v78
    %v96 = vunpack.c.l.b16 %v92
    %v97 = vrot.slane %v94, 7
    %vm98 = vcmask 1041409
    %v99 = vsel %vm98, %v97, %v93
    %v100 = vrot.slane %v95, 6
    %vm101 = vcmask 1042434
    %v102 = vsel %vm101, %v100, %v99
    %v103 = vrot.slane %v96, 5
    %vm104 = vcmask 1043459
    %v105 = vsel %vm104, %v103, %v102
    %v106 = vpack.c.b16 %v105, %v105
    %vm108 = vcmask 238592
    %109 = vst.msk [vmem:[#allocation2] sm:$0x3] %vm108, %v106
    %v110 = vld [vmem:[%s0] sm:$0x1]
    %v111 = vld [vmem:[%s0 + $0x1] sm:$0x1]
    %v112 = vld [vmem:[%s0 + $0x2] sm:$0x1]
    %v113 = vld [vmem:[%s0 + $0x3] sm:$0x1]
    %v119 = vunpack.c.l.s4 1935823168
    %v120 = vunpack.c.0.s8 %v119
    %v121 = vlaneseq
    %v122 = vshrl.u32 %v121, 7
    %v123 = vsub.s32 %v120, %v122
    %v124 = vrot.slane %v110, %v123
    %v126 = vunpack.c.l.s4 1935823168
    %v127 = vunpack.c.0.s8 %v126
    %v128 = vlaneseq
    %v129 = vshrl.u32 %v128, 7
    %v130 = vsub.s32 %v127, %v129
    %v131 = vrot.slane %v124, %v130
    %v133 = vunpack.c.l.s4 1935823168
    %v134 = vunpack.c.0.s8 %v133
    %v135 = vlaneseq
    %v136 = vshrl.u32 %v135, 7
    %v137 = vsub.s32 %v134, %v136
    %v138 = vrot.slane %v111, %v137
    %v140 = vunpack.c.l.s4 1935823168
    %v141 = vunpack.c.0.s8 %v140
    %v142 = vlaneseq
    %v143 = vshrl.u32 %v142, 7
    %v144 = vsub.s32 %v141, %v143
    %v145 = vrot.slane %v138, %v144
    %v147 = vunpack.c.l.s4 1935823168
    %v148 = vunpack.c.0.s8 %v147
    %v149 = vlaneseq
    %v150 = vshrl.u32 %v149, 7
    %v151 = vsub.s32 %v148, %v150
    %v152 = vrot.slane %v112, %v151
    %v154 = vunpack.c.l.s4 1935823168
    %v155 = vunpack.c.0.s8 %v154
    %v156 = vlaneseq
    %v157 = vshrl.u32 %v156, 7
    %v158 = vsub.s32 %v155, %v157
    %v159 = vrot.slane %v152, %v158
    %v161 = vunpack.c.l.s4 1935823168
    %v162 = vunpack.c.0.s8 %v161
    %v163 = vlaneseq
    %v164 = vshrl.u32 %v163, 7
    %v165 = vsub.s32 %v162, %v164
    %v166 = vrot.slane %v113, %v165
    %v168 = vunpack.c.l.s4 1935823168
    %v169 = vunpack.c.0.s8 %v168
    %v170 = vlaneseq
    %v171 = vshrl.u32 %v170, 7
    %v172 = vsub.s32 %v169, %v171
    %v173 = vrot.slane %v166, %v172
    %v174 = vunpack.c.l.b16 %v131
    %v175 = vunpack.c.l.b16 %v145
    %v176 = vunpack.c.l.b16 %v159
    %v177 = vunpack.c.l.b16 %v173
    %v178 = vrot.slane %v174, 1
    %v179 = vsel %vm98, %v175, %v178
    %v180 = vrot.slane %v176, 7
    %v181 = vsel %vm101, %v180, %v179
    %v182 = vrot.slane %v177, 6
    %v183 = vsel %vm104, %v182, %v181
    %v184 = vpack.c.b16 %v183, %v183
    %185 = vrot.lane.b32.xlu0 %v184, 30
    %v186 = vpop.permute.xlu0 %185
    %vm188 = vcmask 484592
    %189 = vst.msk [vmem:[#allocation2] sm:$0x3] %vm188, %v186
    %v190 = vld [vmem:[%s0] sm:$0x1]
    %v191 = vld [vmem:[%s0 + $0x1] sm:$0x1]
    %v192 = vld [vmem:[%s0 + $0x2] sm:$0x1]
    %v193 = vld [vmem:[%s0 + $0x3] sm:$0x1]
    %v198 = vcombine.low %v190, %v190
    %v200 = vunpack.c.l.s4 1935823168
    %v201 = vunpack.c.0.s8 %v200
    %v202 = vlaneseq
    %v203 = vshrl.u32 %v202, 7
    %v204 = vsub.s32 %v201, %v203
    %v205 = vrot.slane %v198, %v204
    %v207 = vunpack.c.l.s4 1935823168
    %v208 = vunpack.c.0.s8 %v207
    %v209 = vlaneseq
    %v210 = vshrl.u32 %v209, 7
    %v211 = vsub.s32 %v208, %v210
    %v212 = vrot.slane %v205, %v211
    %v213 = vcombine.low %v191, %v191
    %v215 = vunpack.c.l.s4 1935823168
    %v216 = vunpack.c.0.s8 %v215
    %v217 = vlaneseq
    %v218 = vshrl.u32 %v217, 7
    %v219 = vsub.s32 %v216, %v218
    %v220 = vrot.slane %v213, %v219
    %v222 = vunpack.c.l.s4 1935823168
    %v223 = vunpack.c.0.s8 %v222
    %v224 = vlaneseq
    %v225 = vshrl.u32 %v224, 7
    %v226 = vsub.s32 %v223, %v225
    %v227 = vrot.slane %v220, %v226
    %v228 = vcombine.low %v192, %v192
    %v230 = vunpack.c.l.s4 1935823168
    %v231 = vunpack.c.0.s8 %v230
    %v232 = vlaneseq
    %v233 = vshrl.u32 %v232, 7
    %v234 = vsub.s32 %v231, %v233
    %v235 = vrot.slane %v228, %v234
    %v237 = vunpack.c.l.s4 1935823168
    %v238 = vunpack.c.0.s8 %v237
    %v239 = vlaneseq
    %v240 = vshrl.u32 %v239, 7
    %v241 = vsub.s32 %v238, %v240
    %v242 = vrot.slane %v235, %v241
    %v243 = vcombine.low %v193, %v193
    %v245 = vunpack.c.l.s4 1935823168
    %v246 = vunpack.c.0.s8 %v245
    %v247 = vlaneseq
    %v248 = vshrl.u32 %v247, 7
    %v249 = vsub.s32 %v246, %v248
    %v250 = vrot.slane %v243, %v249
    %v252 = vunpack.c.l.s4 1935823168
    %v253 = vunpack.c.0.s8 %v252
    %v254 = vlaneseq
    %v255 = vshrl.u32 %v254, 7
    %v256 = vsub.s32 %v253, %v255
    %v257 = vrot.slane %v250, %v256
    %v258 = vunpack.c.l.b16 %v212
    %v259 = vunpack.c.l.b16 %v227
    %v260 = vunpack.c.l.b16 %v242
    %v261 = vunpack.c.l.b16 %v257
    %v262 = vrot.slane %v259, 7
    %vm263 = vcmask 1045509
    %v264 = vsel %vm263, %v262, %v258
    %v265 = vrot.slane %v260, 6
    %vm266 = vcmask 1046534
    %v267 = vsel %vm266, %v265, %v264
    %v268 = vrot.slane %v261, 5
    %vm269 = vcmask 1047559
    %v270 = vsel %vm269, %v268, %v267
    %v271 = vpack.c.b16 %v270, %v270
    %272 = vrot.lane.b32.xlu0 %v271, 127
    %v273 = vpop.permute.xlu0 %272
    %vm275 = vcmask 240642
    %276 = vst.msk [vmem:[#allocation2] sm:$0xc] %vm275, %v273
    %v277 = vld [vmem:[%s0] sm:$0x1]
    %v278 = vld [vmem:[%s0 + $0x1] sm:$0x1]
    %v279 = vld [vmem:[%s0 + $0x2] sm:$0x1]
    %v280 = vld [vmem:[%s0 + $0x3] sm:$0x1]
    %v286 = vunpack.c.l.s4 1935823168
    %v287 = vunpack.c.0.s8 %v286
    %v288 = vlaneseq
    %v289 = vshrl.u32 %v288, 7
    %v290 = vsub.s32 %v287, %v289
    %v291 = vrot.slane %v277, %v290
    %v293 = vunpack.c.l.s4 1935823168
    %v294 = vunpack.c.0.s8 %v293
    %v295 = vlaneseq
    %v296 = vshrl.u32 %v295, 7
    %v297 = vsub.s32 %v294, %v296
    %v298 = vrot.slane %v291, %v297
    %v300 = vunpack.c.l.s4 1935823168
    %v301 = vunpack.c.0.s8 %v300
    %v302 = vlaneseq
    %v303 = vshrl.u32 %v302, 7
    %v304 = vsub.s32 %v301, %v303
    %v305 = vrot.slane %v278, %v304
    %v307 = vunpack.c.l.s4 1935823168
    %v308 = vunpack.c.0.s8 %v307
    %v309 = vlaneseq
    %v310 = vshrl.u32 %v309, 7
    %v311 = vsub.s32 %v308, %v310
    %v312 = vrot.slane %v305, %v311
    %v314 = vunpack.c.l.s4 1935823168
    %v315 = vunpack.c.0.s8 %v314
    %v316 = vlaneseq
    %v317 = vshrl.u32 %v316, 7
    %v318 = vsub.s32 %v315, %v317
    %v319 = vrot.slane %v279, %v318
    %v321 = vunpack.c.l.s4 1935823168
    %v322 = vunpack.c.0.s8 %v321
    %v323 = vlaneseq
    %v324 = vshrl.u32 %v323, 7
    %v325 = vsub.s32 %v322, %v324
    %v326 = vrot.slane %v319, %v325
    %v328 = vunpack.c.l.s4 1935823168
    %v329 = vunpack.c.0.s8 %v328
    %v330 = vlaneseq
    %v331 = vshrl.u32 %v330, 7
    %v332 = vsub.s32 %v329, %v331
    %v333 = vrot.slane %v280, %v332
    %v335 = vunpack.c.l.s4 1935823168
    %v336 = vunpack.c.0.s8 %v335
    %v337 = vlaneseq
    %v338 = vshrl.u32 %v337, 7
    %v339 = vsub.s32 %v336, %v338
    %v340 = vrot.slane %v333, %v339
    %v341 = vunpack.c.l.b16 %v298
    %v342 = vunpack.c.l.b16 %v312
    %v343 = vunpack.c.l.b16 %v326
    %v344 = vunpack.c.l.b16 %v340
    %v345 = vrot.slane %v341, 5
    %v346 = vrot.slane %v342, 4
    %v347 = vsel %vm263, %v346, %v345
    %v348 = vrot.slane %v343, 3
    %v349 = vsel %vm266, %v348, %v347
    %v350 = vrot.slane %v344, 2
    %v351 = vsel %vm269, %v350, %v349
    %v352 = vpack.c.b16 %v351, %v351
    %353 = vrot.lane.b32.xlu0 %v352, 29
    %v354 = vpop.permute.xlu0 %353
    %vm356 = vcmask 486642
    %357 = vst.msk [vmem:[#allocation2] sm:$0xc] %vm356, %v354
    %v358 = vld [vmem:[%s0] sm:$0x1]
    %v359 = vld [vmem:[%s0 + $0x1] sm:$0x1]
    %v360 = vld [vmem:[%s0 + $0x2] sm:$0x1]
    %v361 = vld [vmem:[%s0 + $0x3] sm:$0x1]
    %v367 = vunpack.c.l.s4 1935823168
    %v368 = vunpack.c.0.s8 %v367
    %v369 = vlaneseq
    %v370 = vshrl.u32 %v369, 7
    %v371 = vsub.s32 %v368, %v370
    %v372 = vrot.slane %v358, %v371
    %v374 = vunpack.c.l.s4 1935823168
    %v375 = vunpack.c.0.s8 %v374
    %v376 = vlaneseq
    %v377 = vshrl.u32 %v376, 7
    %v378 = vsub.s32 %v375, %v377
    %v379 = vrot.slane %v372, %v378
    %v381 = vunpack.c.l.s4 1935823168
    %v382 = vunpack.c.0.s8 %v381
    %v383 = vlaneseq
    %v384 = vshrl.u32 %v383, 7
    %v385 = vsub.s32 %v382, %v384
    %v386 = vrot.slane %v359, %v385
    %v388 = vunpack.c.l.s4 1935823168
    %v389 = vunpack.c.0.s8 %v388
    %v390 = vlaneseq
    %v391 = vshrl.u32 %v390, 7
    %v392 = vsub.s32 %v389, %v391
    %v393 = vrot.slane %v386, %v392
    %v395 = vunpack.c.l.s4 1935823168
    %v396 = vunpack.c.0.s8 %v395
    %v397 = vlaneseq
    %v398 = vshrl.u32 %v397, 7
    %v399 = vsub.s32 %v396, %v398
    %v400 = vrot.slane %v360, %v399
    %v402 = vunpack.c.l.s4 1935823168
    %v403 = vunpack.c.0.s8 %v402
    %v404 = vlaneseq
    %v405 = vshrl.u32 %v404, 7
    %v406 = vsub.s32 %v403, %v405
    %v407 = vrot.slane %v400, %v406
    %v409 = vunpack.c.l.s4 1935823168
    %v410 = vunpack.c.0.s8 %v409
    %v411 = vlaneseq
    %v412 = vshrl.u32 %v411, 7
    %v413 = vsub.s32 %v410, %v412
    %v414 = vrot.slane %v361, %v413
    %v416 = vunpack.c.l.s4 1935823168
    %v417 = vunpack.c.0.s8 %v416
    %v418 = vlaneseq
    %v419 = vshrl.u32 %v418, 7
    %v420 = vsub.s32 %v417, %v419
    %v421 = vrot.slane %v414, %v420
    %v422 = vunpack.c.l.b16 %v379
    %v423 = vunpack.c.l.b16 %v393
    %v424 = vunpack.c.l.b16 %v407
    %v425 = vunpack.c.l.b16 %v421
    %v426 = vrot.slane %v423, 7
    %v427 = vsel %vm98, %v426, %v422
    %v428 = vrot.slane %v424, 6
    %v429 = vsel %vm101, %v428, %v427
    %v430 = vrot.slane %v425, 5
    %v431 = vsel %vm104, %v430, %v429
    %v432 = vpack.c.b16 %v431, %v431
    %433 = vrot.lane.b32.xlu0 %v432, 126
    %v434 = vpop.permute.xlu0 %433
    %436 = vst.msk [vmem:[#allocation2 + $0x4] sm:$0x3] %vm108, %v434
    %v437 = vld [vmem:[%s0] sm:$0x1]
    %v438 = vld [vmem:[%s0 + $0x1] sm:$0x1]
    %v439 = vld [vmem:[%s0 + $0x2] sm:$0x1]
    %v440 = vld [vmem:[%s0 + $0x3] sm:$0x1]
    %v446 = vunpack.c.l.s4 1935823168
    %v447 = vunpack.c.0.s8 %v446
    %v448 = vlaneseq
    %v449 = vshrl.u32 %v448, 7
    %v450 = vsub.s32 %v447, %v449
    %v451 = vrot.slane %v437, %v450
    %v453 = vunpack.c.l.s4 1935823168
    %v454 = vunpack.c.0.s8 %v453
    %v455 = vlaneseq
    %v456 = vshrl.u32 %v455, 7
    %v457 = vsub.s32 %v454, %v456
    %v458 = vrot.slane %v451, %v457
    %v460 = vunpack.c.l.s4 1935823168
    %v461 = vunpack.c.0.s8 %v460
    %v462 = vlaneseq
    %v463 = vshrl.u32 %v462, 7
    %v464 = vsub.s32 %v461, %v463
    %v465 = vrot.slane %v438, %v464
    %v467 = vunpack.c.l.s4 1935823168
    %v468 = vunpack.c.0.s8 %v467
    %v469 = vlaneseq
    %v470 = vshrl.u32 %v469, 7
    %v471 = vsub.s32 %v468, %v470
    %v472 = vrot.slane %v465, %v471
    %v474 = vunpack.c.l.s4 1935823168
    %v475 = vunpack.c.0.s8 %v474
    %v476 = vlaneseq
    %v477 = vshrl.u32 %v476, 7
    %v478 = vsub.s32 %v475, %v477
    %v479 = vrot.slane %v439, %v478
    %v481 = vunpack.c.l.s4 1935823168
    %v482 = vunpack.c.0.s8 %v481
    %v483 = vlaneseq
    %v484 = vshrl.u32 %v483, 7
    %v485 = vsub.s32 %v482, %v484
    %v486 = vrot.slane %v479, %v485
    %v488 = vunpack.c.l.s4 1935823168
    %v489 = vunpack.c.0.s8 %v488
    %v490 = vlaneseq
    %v491 = vshrl.u32 %v490, 7
    %v492 = vsub.s32 %v489, %v491
    %v493 = vrot.slane %v440, %v492
    %v495 = vunpack.c.l.s4 1935823168
    %v496 = vunpack.c.0.s8 %v495
    %v497 = vlaneseq
    %v498 = vshrl.u32 %v497, 7
    %v499 = vsub.s32 %v496, %v498
    %v500 = vrot.slane %v493, %v499
    %v501 = vunpack.c.l.b16 %v458
    %v502 = vunpack.c.l.b16 %v472
    %v503 = vunpack.c.l.b16 %v486
    %v504 = vunpack.c.l.b16 %v500
    %v505 = vrot.slane %v501, 1
    %v506 = vsel %vm98, %v502, %v505
    %v507 = vrot.slane %v503, 7
    %v508 = vsel %vm101, %v507, %v506
    %v509 = vrot.slane %v504, 6
    %v510 = vsel %vm104, %v509, %v508
    %v511 = vpack.c.b16 %v510, %v510
    %512 = vrot.lane.b32.xlu0 %v511, 28
    %v513 = vpop.permute.xlu0 %512
    %515 = vst.msk [vmem:[#allocation2 + $0x4] sm:$0x3] %vm188, %v513
    %v516 = vld [vmem:[%s1] sm:$0xf]
    %v517 = vld [vmem:[%s1 + $0x4] sm:$0xf]
    %v518 = vld [vmem:[#allocation2] sm:$0xf]
    %v519 = vld [vmem:[#allocation2 + $0x4] sm:$0x3]
    %v520 = vld [vmem:[%s2] sm:$0xff]
    %v521 = vld [vmem:[%s2 + $0x8] sm:$0xff]
    %523 = vset.pattern.permute.xlu0 0
    %524 = vperm.xlu0 %523, %v520
    %v525 = vpop.permute.xlu0 %524
    %528 = vset.pattern.permute.xlu0 0
    %529 = vperm.xlu0 %528, %v521
    %v530 = vpop.permute.xlu0 %529
    %v534 = vunpack.c.l.b16 %v516
    %v535 = vunpack.c.l.b16 %v517
    %v536 = vpack.c.b16 %v535, %v534
    %v539 = vunpack.c.l.b16 %v518
    %v540 = vunpack.c.l.b16 %v519
    %v541 = vpack.c.b16 %v540, %v539
    %vm542 = vcmask 97280
    %v544 = vsel %vm542, %v536, 0
    %vm546 = vcmask 1045504
    %v548 = vsel %vm546, %v541, 0
    %550 = vmatprep.subr.bf16.mxu0 0
    %551 = vmatpush1.bf16.msra.mxu0 %v548
    %552 = vmatprep.subr.bf16.mxu0 0
    %553 = vmatpush1.bf16.msra.mxu0 0
    %554 = vmatprep.subr.bf16.mxu0 0
    %555 = vmatpush1.bf16.msra.mxu0 0
    %556 = vmatprep.subr.bf16.mxu0 0
    %557 = vmatpush1.bf16.msra.mxu0 0
    %558 = vmatprep.subr.bf16.mxu0 0
    %559 = vmatpush1.bf16.msra.mxu0 0
    %560 = vmatprep.subr.bf16.mxu0 0
    %561 = vmatpush1.bf16.msra.mxu0 0
    %562 = vmatprep.subr.bf16.mxu0 0
    %563 = vmatpush1.bf16.msra.mxu0 0
    %564 = vmatprep.subr.bf16.mxu0 0
    %565 = vmatpush1.bf16.msra.mxu0 0
    %566 = vmatprep.subr.bf16.mxu0 0
    %567 = vmatpush1.bf16.msra.mxu0 0
    %568 = vmatprep.subr.bf16.mxu0 0
    %569 = vmatpush1.bf16.msra.mxu0 0
    %570 = vmatprep.subr.bf16.mxu0 0
    %571 = vmatpush1.bf16.msra.mxu0 0
    %572 = vmatprep.subr.bf16.mxu0 0
    %573 = vmatpush1.bf16.msra.mxu0 0
    %574 = vmatprep.subr.bf16.mxu0 0
    %575 = vmatpush1.bf16.msra.mxu0 0
    %576 = vmatprep.subr.bf16.mxu0 0
    %577 = vmatpush1.bf16.msra.mxu0 0
    %578 = vmatprep.subr.bf16.mxu0 0
    %579 = vmatpush1.bf16.msra.mxu0 0
    %580 = vmatprep.subr.bf16.mxu0 0
    %581 = vmatpush1.bf16.msra.mxu0 0
    %582 = vmatprep.mubr.bf16.mxu0 0
    %583 = vmatmul.mubr.bf16.gmra.mrb[0].mxu0 %v544
    %v584 = vpop.f32.mrb[0].mxu0
    %v585 = vadd.f32 %v525, %v584
    %v586 = vpop.f32.mrb[0].mxu0
    %v587 = vpop.f32.mrb[0].mxu0
    %v588 = vadd.f32 %v530, %v587
    %v589 = vpop.f32.mrb[0].mxu0
    %590 = vdwg.mxu0
    %v591 = vmax.f32 %v585, 0.0
    %v592 = vmax.f32 %v588, 0.0
    %v593 = vld [vmem:[#allocation3] sm:$0xff]
    %v594 = vld [vmem:[#allocation3 + $0x8] sm:$0xff]
    %vm595 = vcmask 490496
    %v596 = vsel %vm595, %v591, 0.0
    %597 = vadd.xlane.f32.xlu0 %v596
    %v598 = vpop.xlane.xlu0 %597
    %v599 = vsel %vm595, %v592, 0.0
    %600 = vadd.xlane.f32.xlu0 %v599
    %v601 = vpop.xlane.xlu0 %600
    %v602 = vadd.f32 %v593, %v598
    %v603 = vadd.f32 %v594, %v601
    %vm604 = vcmask 7168
    %605 = vst.msk [vmem:[#allocation3] sm:$0xff] %vm604, %v602
    %606 = vst.msk [vmem:[#allocation3 + $0x8] sm:$0xff] %vm604, %v603
    %s607 = smul.u32 0, 2
    %s608 = smul.u32 %s607, 16
    %s609 = scalar_lea.vmem [#allocation4], %s608
    %vm610 = vcmask 244736
    %611 = vst.msk [vmem:[%s609] sm:$0xff] %vm610, %v591
    %612 = vst.msk [vmem:[%s609 + $0x8] sm:$0xff] %vm610, %v592
    %s613 = sadd.s32 %s607, 1
    %616 = vrot.lane.b32.xlu0 %v591, 98
    %v617 = vpop.permute.xlu0 %616
    %618 = vrot.lane.b32.xlu0 %v592, 98
    %v619 = vpop.permute.xlu0 %618
    %s622 = smul.u32 %s613, 16
    %s623 = scalar_lea.vmem [#allocation4], %s622
    %624 = vst.msk [vmem:[%s623] sm:$0xff] %vm610, %v617
    %625 = vst.msk [vmem:[%s623 + $0x8] sm:$0xff] %vm610, %v619
    // Predicated region
    $region26: #{conv_block.1} parent=1 // pred_check
      %p626 = pneg %p22
    $region27: #{conv_block.1} parent=1 // pred_check_branch
      %628 = sbr.rel (%p626) target = $region29
    $region28: #{conv_block.1} parent=1 // pred_region
      %v629 = vld [vmem:[#allocation3] sm:$0xff]
      %v630 = vld [vmem:[#allocation3 + $0x8] sm:$0xff]
      %v631 = vmul.f32 %v629, 0.016666668
      %v632 = vmul.f32 %v630, 0.016666668
      loop: start=0, step=1, limit=2
      $region30: #{conv_block.1} parent=28 // loop_pre_header
        _
      $region31: #{conv_block.1} parent=28 // loop_header
        %s634 = sphi 0, %s638
        %p635 = scmp.ge.s32.totalorder %s634, 2
        %v639 = vphi 0.0, %v665
        %v640 = vphi 0.0, %v666
      $region32: #{conv_block.1} parent=28 // loop_header_branch
        %637 = sbr.rel (%p635) target = $region36
      $region33: #{conv_block.1} parent=28 // loop_body
        %s641 = smul.u32 %s634, 16
        %s642 = scalar_lea.vmem [#allocation4], %s641
        %v643 = vld [vmem:[%s642] sm:$0xff]
        %v644 = vld [vmem:[%s642 + $0x8] sm:$0xff]
        %646 = vset.pattern.permute.xlu0 0
        %647 = vperm.xlu0 %646, %v631
        %v648 = vpop.permute.xlu0 %647
        %651 = vset.pattern.permute.xlu0 0
        %652 = vperm.xlu0 %651, %v632
        %v653 = vpop.permute.xlu0 %652
        %v655 = vsub.f32 %v643, %v648
        %v656 = vsub.f32 %v644, %v653
        %v657 = vmul.f32 %v655, %v655
        %v658 = vmul.f32 %v656, %v656
        %v659 = vsel %vm610, %v657, 0.0
        %660 = vadd.xlane.f32.xlu0 %v659
        %v661 = vpop.xlane.xlu0 %660
        %v662 = vsel %vm610, %v658, 0.0
        %663 = vadd.xlane.f32.xlu0 %v662
        %v664 = vpop.xlane.xlu0 %663
        %v665 = vadd.f32 %v639, %v661
        %v666 = vadd.f32 %v640, %v664
      $region34: #{conv_block.1} parent=28 // loop_footer
        %s638 = sadd.s32 1, %s634
      $region35: #{conv_block.1} parent=28 // loop_footer_branch
        %633 = sbr.rel target = $region31
      $region36: #{conv_block.1} parent=28 // loop_exit
        _
      %v667 = vmul.f32 %v639, 0.016666668
      %v668 = vmul.f32 %v640, 0.016666668
      %v669 = vadd.f32 %v667, 1e-05
      %v670 = vadd.f32 %v668, 1e-05
      %v671 = vrsqrt.pop %v669
      %v672 = vrsqrt.pop %v670
      %v673 = vld [vmem:[%s3] sm:$0xff]
      %v674 = vld [vmem:[%s3 + $0x8] sm:$0xff]
      %v675 = vmul.f32 %v673, %v671
      %v676 = vmul.f32 %v674, %v672
      %v677 = vld [vmem:[%s4] sm:$0xff]
      %v678 = vld [vmem:[%s4 + $0x8] sm:$0xff]
      %v679 = vmul.f32 %v631, %v675
      %v680 = vmul.f32 %v632, %v676
      %v681 = vsub.f32 %v677, %v679
      %v682 = vsub.f32 %v678, %v680
      loop: start=0, step=1, limit=2
      $region37: #{conv_block.1} parent=28 // loop_pre_header
        _
      $region38: #{conv_block.1} parent=28 // loop_header
        %s684 = sphi 0, %s688
        %p685 = scmp.ge.s32.totalorder %s684, 2
      $region39: #{conv_block.1} parent=28 // loop_header_branch
        %687 = sbr.rel (%p685) target = $region43
      $region40: #{conv_block.1} parent=28 // loop_body
        %s689 = smul.u32 %s684, 16
        %s690 = scalar_lea.vmem [#allocation4], %s689
        %v691 = vld [vmem:[%s690] sm:$0xff]
        %v692 = vld [vmem:[%s690 + $0x8] sm:$0xff]
        %694 = vset.pattern.permute.xlu0 0
        %695 = vperm.xlu0 %694, %v675
        %v696 = vpop.permute.xlu0 %695
        %699 = vset.pattern.permute.xlu0 0
        %700 = vperm.xlu0 %699, %v676
        %v701 = vpop.permute.xlu0 %700
        %v703 = vmul.f32 %v691, %v696
        %v704 = vmul.f32 %v692, %v701
        %706 = vset.pattern.permute.xlu0 0
        %707 = vperm.xlu0 %706, %v681
        %v708 = vpop.permute.xlu0 %707
        %711 = vset.pattern.permute.xlu0 0
        %712 = vperm.xlu0 %711, %v682
        %v713 = vpop.permute.xlu0 %712
        %v715 = vadd.f32 %v703, %v708
        %v716 = vadd.f32 %v704, %v713
        %717 = vst.msk [vmem:[%s690] sm:$0xff] %vm610, %v715
        %718 = vst.msk [vmem:[%s690 + $0x8] sm:$0xff] %vm610, %v716
      $region41: #{conv_block.1} parent=28 // loop_footer
        %s688 = sadd.s32 1, %s684
      $region42: #{conv_block.1} parent=28 // loop_footer_branch
        %683 = sbr.rel target = $region38
      $region43: #{conv_block.1} parent=28 // loop_exit
        _
    $region29: #{conv_block.1} parent=1 // pred_fallthru
      _
    // Predicated region
    $region44: #{conv_block.1} parent=1 // pred_check
      _
    $region45: #{conv_block.1} parent=1 // pred_check_branch
      %720 = sbr.rel (0) target = $region47
    $region46: #{conv_block.1} parent=1 // pred_region
      %s722 = ssub.s32 512, 512
      %723 = vsyncadd [#allocation5], %s722
      %s724 = sshll.u32 [#allocation4], 4
      %s725 = int_to_ptr.vmem [resolvable:$true] %s724
      %730 = dma.vmem_to_hbm [thread:$0]  %s725, 512, %s5, [#allocation5], 128, 128, 8
    $region47: #{conv_block.1} parent=1 // pred_fallthru
      _
    // Predicated region
    $region48: #{conv_block.1} parent=1 // pred_check
      _
    $region49: #{conv_block.1} parent=1 // pred_check_branch
      %732 = sbr.rel (0) target = $region51
    $region50: #{conv_block.1} parent=1 // pred_region
      %733 = dma.done [#allocation5], 512
    $region51: #{conv_block.1} parent=1 // pred_fallthru
      _
    %734 = vsyncpa [#allocation5], 1

</llo_original>
